<compile_context>
chip_gen: v7x
topology: tpu7x:2x2x1
jax: 0.10.0
libtpu: 0.0.40
codegen_flags: <defaults>
</compile_context>

<pallas_src>
import functools

import jax
import jax.numpy as jnp
from jax.experimental import pallas as pl
from jax.experimental.pallas import tpu as pltpu


def _round_up(x, m):
    return ((x + m - 1) // m) * m


def _make_psp_kernel(row_sizes):
    """Kernel body: packed-weight MLP (matmul + bias + tanh per hidden layer)."""
    n_linears = len(row_sizes)
    offs = [0]
    for r in row_sizes:
        offs.append(offs[-1] + r)

    def kernel(obs_ref, w_ref, b_ref, out_ref):
        # obs_ref : (bt, ob_pad)              bf16
        # w_ref   : (sum(row_sizes), L)       bf16  all layers' hash-folded weights
        # b_ref   : (8, L)                    f32   row l = bias of linear l (zero-padded)
        # out_ref : (bt, L)                   f32   lane-dense; cols >= ac_dim are zero
        h = obs_ref[...]                                   # bf16 activations into MXU
        for l in range(n_linears):
            w = w_ref[offs[l]:offs[l + 1], :]              # static slice: no copy
            acc = jnp.dot(h, w, preferred_element_type=jnp.float32)
            acc = acc + b_ref[l:l + 1, :]                  # f32 bias add (VPU)
            if l < n_linears - 1:
                h = jnp.tanh(acc).astype(jnp.bfloat16)     # tanh in f32 (EUP), bf16 to MXU
            else:
                out_ref[...] = acc

    return kernel


def init_psp_params(key, ob_dim, ac_dim, size, n_layers, period):
    """Deterministic synthetic parameters matching the torch module's structure."""
    dims = [ob_dim] + [size] * n_layers + [ac_dim]
    raw = {"weights": [], "biases": [], "contexts": []}
    for l in range(n_layers + 1):
        key, kw, kc = jax.random.split(key, 3)
        d_in, d_out = dims[l], dims[l + 1]
        bound = 1.0 / float(d_in) ** 0.5
        w = jax.random.uniform(kw, (d_in, d_out), jnp.float32, -bound, bound)
        b = jnp.zeros((d_out,), jnp.float32)
        ctx = jnp.sign(jax.random.normal(kc, (period, d_in), jnp.float32))
        ctx = jnp.where(ctx == 0.0, 1.0, ctx)              # +/-1 "hash" routing vectors
        raw["weights"].append(w)
        raw["biases"].append(b)
        raw["contexts"].append(ctx)
    raw["logstd"] = jnp.zeros((ac_dim,), jnp.float32)       # nn.Parameter(zeros)
    return raw


def pack_psp_params(raw, ob_dim, ac_dim, size, n_layers, period):
    """Fold the +/-1 hash contexts into the weights (one copy per phase) and pack
    all layers into two lane-padded buffers -> 3 kernel operands total."""
    dims = [ob_dim] + [size] * n_layers + [ac_dim]
    n_linears = n_layers + 1
    ob_pad = _round_up(ob_dim, 8)
    lane_pad = _round_up(max(size, ac_dim), 128)
    row_sizes = [ob_pad] + [lane_pad] * n_layers
    R = sum(row_sizes)

    w_packed = jnp.zeros((period, R, lane_pad), jnp.float32)
    b_packed = jnp.zeros((_round_up(n_linears, 8), lane_pad), jnp.float32)
    off = 0
    for l in range(n_linears):
        d_in, d_out = dims[l], dims[l + 1]
        # W_phase[p] = diag(ctx[p]) @ W  -- the element-wise hash multiply folded in.
        wf = raw["contexts"][l][:, :, None] * raw["weights"][l][None, :, :]
        w_packed = w_packed.at[:, off:off + d_in, :d_out].set(wf)
        b_packed = b_packed.at[l, :d_out].set(raw["biases"][l])
        off += row_sizes[l]

    return {
        "w_packed": w_packed.astype(jnp.bfloat16),  # bf16 weights: native MXU, half DMA
        "b_packed": b_packed,                       # bias/tanh math stays f32 (v5e safe)
        "logstd": raw["logstd"],
    }


@functools.partial(jax.jit, static_argnames=("period",))
def psp_policy_forward(obs, params, time, *, period):
    """Returns (batch_mean [B, ac_dim], batch_scale_tril [B, ac_dim, ac_dim])."""
    B, ob_dim = obs.shape
    ac_dim = params["logstd"].shape[-1]
    lane_pad = params["w_packed"].shape[-1]
    R = params["w_packed"].shape[1]
    ob_pad = _round_up(ob_dim, 8)
    n_layers = (R - ob_pad) // lane_pad
    row_sizes = [ob_pad] + [lane_pad] * n_layers
    n_bias_rows = params["b_packed"].shape[0]

    # Batch tile: one block for small B; 512-row tiles (pipelined + megacore
    # "parallel") once the batch grows. Per-step VMEM stays tiny on all gens.
    if B > 512:
        bt = 512
        B_pad = _round_up(B, bt)
    else:
        B_pad = _round_up(B, 8)
        bt = B_pad
    grid = (B_pad // bt,)

    # Glue: phase-select the pre-folded weights; pad + bf16-cast obs. std/scale_tril
    # are obs-independent and never enter the kernel.
    phase = time % period
    w_phase = jax.lax.dynamic_index_in_dim(
        params["w_packed"], phase, axis=0, keepdims=False)          # (R, lane_pad) bf16
    obs_p = obs
    if (B_pad != B) or (ob_pad != ob_dim):
        obs_p = jnp.pad(obs, ((0, B_pad - B), (0, ob_pad - ob_dim)))
    obs_p = obs_p.astype(jnp.bfloat16)

    out = pl.pallas_call(
        _make_psp_kernel(tuple(row_sizes)),
        out_shape=jax.ShapeDtypeStruct((B_pad, lane_pad), jnp.float32),
        grid=grid,
        in_specs=[
            pl.BlockSpec((bt, ob_pad), lambda i: (i, 0)),
            pl.BlockSpec((R, lane_pad), lambda i: (0, 0)),          # resident weights
            pl.BlockSpec((n_bias_rows, lane_pad), lambda i: (0, 0)),
        ],
        out_specs=pl.BlockSpec((bt, lane_pad), lambda i: (i, 0)),   # lane-dense store
        compiler_params=pltpu.CompilerParams(
            dimension_semantics=("parallel",)),
    )(obs_p, w_phase, params["b_packed"])

    mean = out[:B, :ac_dim]

    # Glue: diag(exp(logstd)) repeated over batch -> scale_tril of the
    # MultivariateNormal returned by PSPPolicy.forward.
    # TODO(synk): torch.distributions.MultivariateNormal construction/sampling has no
    # Pallas equivalent; we return the distribution parameters (mean, scale_tril).
    std = jnp.exp(params["logstd"])
    scale_tril = jnp.broadcast_to(jnp.diag(std), (B, ac_dim, ac_dim))
    return mean, scale_tril


def _reference_forward_bf16(obs, raw, time, n_layers, period):
    """Pure-JAX reference mirroring the kernel's numerics (bf16 weights/activations,
    f32 accumulation, f32 bias/tanh)."""
    phase = time % period
    h = obs.astype(jnp.bfloat16)
    for l in range(n_layers + 1):
        ctx = raw["contexts"][l][phase]
        wf = (ctx[:, None] * raw["weights"][l]).astype(jnp.bfloat16)
        h = jnp.dot(h, wf, preferred_element_type=jnp.float32) + raw["biases"][l]
        if l < n_layers:
            h = jnp.tanh(h).astype(jnp.bfloat16)
    return h.astype(jnp.float32)


def _reference_forward_f32(obs, raw, time, n_layers, period):
    """Full-precision module semantics (context multiply, x@W+b, tanh, diag(exp))."""
    phase = time % period
    h = obs
    for l in range(n_layers + 1):
        ctx = raw["contexts"][l][phase]
        h = (h * ctx) @ raw["weights"][l] + raw["biases"][l]
        if l < n_layers:
            h = jnp.tanh(h)
    std = jnp.exp(raw["logstd"])
    tril = jnp.broadcast_to(jnp.diag(std), (obs.shape[0], std.shape[0], std.shape[0]))
    return h, tril


if __name__ == "__main__":
    # Small shapes consistent with the module's constructor arguments.
    B, ob_dim, ac_dim = 8, 16, 4
    size, n_layers, period = 32, 2, 3
    time = 1

    key = jax.random.PRNGKey(0)
    key, k_obs, k_params = jax.random.split(key, 3)
    obs = jax.random.normal(k_obs, (B, ob_dim), jnp.float32)
    raw = init_psp_params(k_params, ob_dim, ac_dim, size, n_layers, period)
    params = pack_psp_params(raw, ob_dim, ac_dim, size, n_layers, period)

    mean, scale_tril = psp_policy_forward(obs, params, time, period=period)
    jax.block_until_ready((mean, scale_tril))

    assert mean.shape == (B, ac_dim)
    assert scale_tril.shape == (B, ac_dim, ac_dim)

    # Tight check against a reference with matching (bf16-weight) numerics.
    ref_bf16 = _reference_forward_bf16(obs, raw, time, n_layers, period)
    assert jnp.allclose(mean, ref_bf16, atol=2e-3, rtol=2e-3)

    # Loose check against the full-f32 module semantics (only bf16 weight storage differs).
    ref_f32_mean, ref_tril = _reference_forward_f32(obs, raw, time, n_layers, period)
    assert jnp.allclose(mean, ref_f32_mean, atol=5e-2, rtol=5e-2)
    assert jnp.allclose(scale_tril, ref_tril, atol=1e-6, rtol=1e-6)

    print("KERNEL_OK")
</pallas_src>

<mosaic_0001>
module attributes {stable_mosaic.version = 11 : i64} {
  func.func @kernel(%arg0: i32, %arg1: memref<8x16xbf16, #tpu.memory_space<vmem>>, %arg2: memref<272x128xbf16, #tpu.memory_space<vmem>>, %arg3: memref<8x128xf32, #tpu.memory_space<vmem>>, %arg4: memref<8x128xf32, #tpu.memory_space<vmem>>) attributes {dimension_semantics = [#tpu.dimension_semantics<parallel>], iteration_bounds = array<i64: 1>, scalar_prefetch = 0 : i64, scratch_operands = 0 : i64, tpu.core_type = #tpu.core_type<tc>, window_params = [{transform_indices = @transform_0, window_bounds = array<i64: 8, 16>}, {pipeline_mode = #tpu.pipeline_mode<synchronous>, transform_indices = @transform_1, window_bounds = array<i64: 272, 128>}, {pipeline_mode = #tpu.pipeline_mode<synchronous>, transform_indices = @transform_2, window_bounds = array<i64: 8, 128>}, {transform_indices = @transform_3, window_bounds = array<i64: 8, 128>}]} {
    %c0 = arith.constant 0 : index
    %c0_0 = arith.constant 0 : index
    %0 = vector.load %arg1[%c0, %c0_0] : memref<8x16xbf16, #tpu.memory_space<vmem>>, vector<8x16xbf16>
    %c0_1 = arith.constant 0 : index
    %c0_2 = arith.constant 0 : index
    %1 = vector.load %arg2[%c0_1, %c0_2] : memref<272x128xbf16, #tpu.memory_space<vmem>>, vector<16x128xbf16>
    %cst = arith.constant dense<0.000000e+00> : vector<8x128xf32>
    %2 = tpu.matmul %0, %1, %cst {dimension_numbers = #tpu.dot_dimension_numbers<[1], [0], [0], [1], [0, 0, 1, 1], [], []>} : vector<8x16xbf16>, vector<16x128xbf16>, vector<8x128xf32> -> vector<8x128xf32>
    %c0_3 = arith.constant 0 : index
    %c0_4 = arith.constant 0 : index
    %3 = vector.load %arg3[%c0_3, %c0_4] : memref<8x128xf32, #tpu.memory_space<vmem>>, vector<1x128xf32>
    %4 = vector.broadcast %3 : vector<1x128xf32> to vector<8x128xf32>
    %5 = arith.addf %2, %4 : vector<8x128xf32>
    %6 = math.tanh %5 : vector<8x128xf32>
    %7 = arith.truncf %6 : vector<8x128xf32> to vector<8x128xbf16>
    %c16 = arith.constant 16 : index
    %c0_5 = arith.constant 0 : index
    %8 = vector.load %arg2[%c16, %c0_5] : memref<272x128xbf16, #tpu.memory_space<vmem>>, vector<128x128xbf16>
    %cst_6 = arith.constant dense<0.000000e+00> : vector<8x128xf32>
    %9 = tpu.matmul %7, %8, %cst_6 {dimension_numbers = #tpu.dot_dimension_numbers<[1], [0], [0], [1], [0, 0, 1, 1], [], []>} : vector<8x128xbf16>, vector<128x128xbf16>, vector<8x128xf32> -> vector<8x128xf32>
    %c1 = arith.constant 1 : index
    %c0_7 = arith.constant 0 : index
    %10 = vector.load %arg3[%c1, %c0_7] : memref<8x128xf32, #tpu.memory_space<vmem>>, vector<1x128xf32>
    %11 = vector.broadcast %10 : vector<1x128xf32> to vector<8x128xf32>
    %12 = arith.addf %9, %11 : vector<8x128xf32>
    %13 = math.tanh %12 : vector<8x128xf32>
    %14 = arith.truncf %13 : vector<8x128xf32> to vector<8x128xbf16>
    %c144 = arith.constant 144 : index
    %c0_8 = arith.constant 0 : index
    %15 = vector.load %arg2[%c144, %c0_8] : memref<272x128xbf16, #tpu.memory_space<vmem>>, vector<128x128xbf16>
    %cst_9 = arith.constant dense<0.000000e+00> : vector<8x128xf32>
    %16 = tpu.matmul %14, %15, %cst_9 {dimension_numbers = #tpu.dot_dimension_numbers<[1], [0], [0], [1], [0, 0, 1, 1], [], []>} : vector<8x128xbf16>, vector<128x128xbf16>, vector<8x128xf32> -> vector<8x128xf32>
    %c2 = arith.constant 2 : index
    %c0_10 = arith.constant 0 : index
    %17 = vector.load %arg3[%c2, %c0_10] : memref<8x128xf32, #tpu.memory_space<vmem>>, vector<1x128xf32>
    %18 = vector.broadcast %17 : vector<1x128xf32> to vector<8x128xf32>
    %19 = arith.addf %16, %18 : vector<8x128xf32>
    %c0_11 = arith.constant 0 : index
    %c0_12 = arith.constant 0 : index
    %20 = vector.load %arg4[%c0_11, %c0_12] : memref<8x128xf32, #tpu.memory_space<vmem>>, vector<8x128xf32>
    tpu.vector_store %arg4[%c0_11, %c0_12], %19 {strides = array<i32>} : memref<8x128xf32, #tpu.memory_space<vmem>>, vector<8x128xf32>,
    return
  }
  func.func @transform_0(%arg0: i32) -> (i32, i32) {
    %c0_i32 = arith.constant 0 : i32
    %c0_i32_0 = arith.constant 0 : i32
    return %arg0, %c0_i32 : i32, i32
  }
  func.func @transform_1(%arg0: i32) -> (i32, i32) {
    %c0_i32 = arith.constant 0 : i32
    %c0_i32_0 = arith.constant 0 : i32
    %c0_i32_1 = arith.constant 0 : i32
    return %c0_i32, %c0_i32_0 : i32, i32
  }
  func.func @transform_2(%arg0: i32) -> (i32, i32) {
    %c0_i32 = arith.constant 0 : i32
    %c0_i32_0 = arith.constant 0 : i32
    %c0_i32_1 = arith.constant 0 : i32
    return %c0_i32, %c0_i32_0 : i32, i32
  }
  func.func @transform_3(%arg0: i32) -> (i32, i32) {
    %c0_i32 = arith.constant 0 : i32
    %c0_i32_0 = arith.constant 0 : i32
    return %arg0, %c0_i32 : i32, i32
  }
}

</mosaic_0001>

<llo_original>
// kernel: psp_policy_forward.1
$region0: #{psp_policy_forward.1}
  #allocation0 [shape = 'u32[]', space=smem, size = 0x4, offset = 0x4, fixed_abs, tag = 'smem constant byte address 0x4 - core index']
  #allocation1 [shape = 'u32[144,128]{1,0:T(1,128)}', space=vmem, size = 0x12000, scoped, tag = 'internal scratch']
  %s0 = inlined_call_operand.vmem [shape: bf16[8,16], index: 0, kind: input, shape index: {}]
  %s1 = inlined_call_operand.vmem [shape: bf16[272,128], index: 1, kind: input, shape index: {}]
  %s2 = inlined_call_operand.vmem [shape: f32[8,128], index: 2, kind: input, shape index: {}]
  %s3 = inlined_call_operand.vmem [shape: f32[8,128], index: 3, kind: output, shape index: {}]
  %s4 = sld [smem:[#allocation0]]
  $region22: #{psp_policy_forward.1} parent=0
    _
  %s6 = ssub.s32 1, %s4
  %s7 = scalar_select 0, %s6, %s4
  // Predicated region
  $region2: #{psp_policy_forward.1} parent=0 // pred_check
    _
  $region3: #{psp_policy_forward.1} parent=0 // pred_check_branch
    %9 = sbr.rel (0) target = $region5
  $region4: #{psp_policy_forward.1} parent=0 // pred_region
    _
  $region5: #{psp_policy_forward.1} parent=0 // pred_fallthru
    _
  // Predicated region
  $region6: #{psp_policy_forward.1} parent=0 // pred_check
    _
  $region7: #{psp_policy_forward.1} parent=0 // pred_check_branch
    %11 = sbr.rel (0) target = $region9
  $region8: #{psp_policy_forward.1} parent=0 // pred_region
    _
  $region9: #{psp_policy_forward.1} parent=0 // pred_fallthru
    _
  // Predicated region
  $region10: #{psp_policy_forward.1} parent=0 // pred_check
    _
  $region11: #{psp_policy_forward.1} parent=0 // pred_check_branch
    %13 = sbr.rel (0) target = $region13
  $region12: #{psp_policy_forward.1} parent=0 // pred_region
    _
  $region13: #{psp_policy_forward.1} parent=0 // pred_fallthru
    _
  %v15 = vld [vmem:[%s0] sm:$0xf]
  %v16 = vld [vmem:[%s1] sm:$0xf]
  %v17 = vld [vmem:[%s1 + $0x4] sm:$0xf]
  %v18 = vld [vmem:[%s2] sm:$0x1]
  %v19 = vlaneseq
  %v20 = vshrl.u32 %v19, 7
  %v21 = vsub.s32 0, %v20
  %v22 = vrot.slane %v18, %v21
  %v25 = vunpack.c.l.b16 %v16
  %v26 = vunpack.c.l.b16 %v17
  %v27 = vpack.c.b16 %v26, %v25
  %vm29 = vcmask 130048
  %v31 = vsel %vm29, %v15, 0
  %33 = vmatprep.subr.bf16.mxu0 0
  %34 = vmatpush1.bf16.msra.mxu0 %v27
  %35 = vmatprep.subr.bf16.mxu0 0
  %36 = vmatpush1.bf16.msra.mxu0 0
  %37 = vmatprep.subr.bf16.mxu0 0
  %38 = vmatpush1.bf16.msra.mxu0 0
  %39 = vmatprep.subr.bf16.mxu0 0
  %40 = vmatpush1.bf16.msra.mxu0 0
  %41 = vmatprep.subr.bf16.mxu0 0
  %42 = vmatpush1.bf16.msra.mxu0 0
  %43 = vmatprep.subr.bf16.mxu0 0
  %44 = vmatpush1.bf16.msra.mxu0 0
  %45 = vmatprep.subr.bf16.mxu0 0
  %46 = vmatpush1.bf16.msra.mxu0 0
  %47 = vmatprep.subr.bf16.mxu0 0
  %48 = vmatpush1.bf16.msra.mxu0 0
  %49 = vmatprep.subr.bf16.mxu0 0
  %50 = vmatpush1.bf16.msra.mxu0 0
  %51 = vmatprep.subr.bf16.mxu0 0
  %52 = vmatpush1.bf16.msra.mxu0 0
  %53 = vmatprep.subr.bf16.mxu0 0
  %54 = vmatpush1.bf16.msra.mxu0 0
  %55 = vmatprep.subr.bf16.mxu0 0
  %56 = vmatpush1.bf16.msra.mxu0 0
  %57 = vmatprep.subr.bf16.mxu0 0
  %58 = vmatpush1.bf16.msra.mxu0 0
  %59 = vmatprep.subr.bf16.mxu0 0
  %60 = vmatpush1.bf16.msra.mxu0 0
  %61 = vmatprep.subr.bf16.mxu0 0
  %62 = vmatpush1.bf16.msra.mxu0 0
  %63 = vmatprep.subr.bf16.mxu0 0
  %64 = vmatpush1.bf16.msra.mxu0 0
  %65 = vmatprep.mubr.bf16.mxu0 0
  %66 = vmatmul.mubr.bf16.gmra.mrb[0].mxu0 %v31
  %v67 = vpop.f32.mrb[0].mxu0
  %v68 = vadd.f32 %v22, %v67
  %v69 = vpop.f32.mrb[0].mxu0
  %v70 = vpop.f32.mrb[0].mxu0
  %v71 = vpop.f32.mrb[0].mxu0
  %72 = vdwg.mxu0
  %v73 = vtanh.pop %v68
  %v74 = vpack.c.bf16 %v73, %v73
  %v75 = vld [vmem:[%s1 + $0x8] sm:$0xf]
  %v76 = vld [vmem:[%s1 + $0xc] sm:$0xf]
  %v77 = vld [vmem:[%s1 + $0x10] sm:$0xf]
  %v78 = vld [vmem:[%s1 + $0x14] sm:$0xf]
  %v79 = vld [vmem:[%s1 + $0x18] sm:$0xf]
  %v80 = vld [vmem:[%s1 + $0x1c] sm:$0xf]
  %v81 = vld [vmem:[%s1 + $0x20] sm:$0xf]
  %v82 = vld [vmem:[%s1 + $0x24] sm:$0xf]
  %v83 = vld [vmem:[%s1 + $0x28] sm:$0xf]
  %v84 = vld [vmem:[%s1 + $0x2c] sm:$0xf]
  %v85 = vld [vmem:[%s1 + $0x30] sm:$0xf]
  %v86 = vld [vmem:[%s1 + $0x34] sm:$0xf]
  %v87 = vld [vmem:[%s1 + $0x38] sm:$0xf]
  %v88 = vld [vmem:[%s1 + $0x3c] sm:$0xf]
  %v89 = vld [vmem:[%s1 + $0x40] sm:$0xf]
  %v90 = vld [vmem:[%s1 + $0x44] sm:$0xf]
  %v91 = vld [vmem:[%s2 + $0x1] sm:$0x1]
  %v92 = vlaneseq
  %v93 = vshrl.u32 %v92, 7
  %v94 = vsub.s32 0, %v93
  %v95 = vrot.slane %v91, %v94
  %v112 = vunpack.c.l.b16 %v75
  %v113 = vunpack.c.l.b16 %v76
  %v114 = vunpack.c.l.b16 %v77
  %v115 = vunpack.c.l.b16 %v78
  %v116 = vunpack.c.l.b16 %v79
  %v117 = vunpack.c.l.b16 %v80
  %v118 = vunpack.c.l.b16 %v81
  %v119 = vunpack.c.l.b16 %v82
  %v120 = vunpack.c.l.b16 %v83
  %v121 = vunpack.c.l.b16 %v84
  %v122 = vunpack.c.l.b16 %v85
  %v123 = vunpack.c.l.b16 %v86
  %v124 = vunpack.c.l.b16 %v87
  %v125 = vunpack.c.l.b16 %v88
  %v126 = vunpack.c.l.b16 %v89
  %v127 = vunpack.c.l.b16 %v90
  %v128 = vpack.c.b16 %v113, %v112
  %v129 = vpack.c.b16 %v115, %v114
  %v130 = vpack.c.b16 %v117, %v116
  %v131 = vpack.c.b16 %v119, %v118
  %v132 = vpack.c.b16 %v121, %v120
  %v133 = vpack.c.b16 %v123, %v122
  %v134 = vpack.c.b16 %v125, %v124
  %v135 = vpack.c.b16 %v127, %v126
  %144 = vmatprep.subr.bf16.mxu0 0
  %145 = vmatpush1.bf16.msra.mxu0 %v128
  %146 = vmatprep.subr.bf16.mxu0 0
  %147 = vmatpush1.bf16.msra.mxu0 %v129
  %148 = vmatprep.subr.bf16.mxu0 0
  %149 = vmatpush1.bf16.msra.mxu0 %v130
  %150 = vmatprep.subr.bf16.mxu0 0
  %151 = vmatpush1.bf16.msra.mxu0 %v131
  %152 = vmatprep.subr.bf16.mxu0 0
  %153 = vmatpush1.bf16.msra.mxu0 %v132
  %154 = vmatprep.subr.bf16.mxu0 0
  %155 = vmatpush1.bf16.msra.mxu0 %v133
  %156 = vmatprep.subr.bf16.mxu0 0
  %157 = vmatpush1.bf16.msra.mxu0 %v134
  %158 = vmatprep.subr.bf16.mxu0 0
  %159 = vmatpush1.bf16.msra.mxu0 %v135
  %160 = vmatprep.subr.bf16.mxu0 0
  %161 = vmatpush1.bf16.msra.mxu0 0
  %162 = vmatprep.subr.bf16.mxu0 0
  %163 = vmatpush1.bf16.msra.mxu0 0
  %164 = vmatprep.subr.bf16.mxu0 0
  %165 = vmatpush1.bf16.msra.mxu0 0
  %166 = vmatprep.subr.bf16.mxu0 0
  %167 = vmatpush1.bf16.msra.mxu0 0
  %168 = vmatprep.subr.bf16.mxu0 0
  %169 = vmatpush1.bf16.msra.mxu0 0
  %170 = vmatprep.subr.bf16.mxu0 0
  %171 = vmatpush1.bf16.msra.mxu0 0
  %172 = vmatprep.subr.bf16.mxu0 0
  %173 = vmatpush1.bf16.msra.mxu0 0
  %174 = vmatprep.subr.bf16.mxu0 0
  %175 = vmatpush1.bf16.msra.mxu0 0
  %176 = vmatprep.mubr.bf16.mxu0 0
  %177 = vmatmul.mubr.bf16.gmra.mrb[0].mxu0 %v74
  %v178 = vpop.f32.mrb[0].mxu0
  %v179 = vadd.f32 %v95, %v178
  %v180 = vpop.f32.mrb[0].mxu0
  %v181 = vpop.f32.mrb[0].mxu0
  %v182 = vpop.f32.mrb[0].mxu0
  %183 = vdwg.mxu0
  %v184 = vtanh.pop %v179
  %v185 = vpack.c.bf16 %v184, %v184
  %v186 = vld [vmem:[%s1 + $0x48] sm:$0xf]
  %v187 = vld [vmem:[%s1 + $0x4c] sm:$0xf]
  %v188 = vld [vmem:[%s1 + $0x50] sm:$0xf]
  %v189 = vld [vmem:[%s1 + $0x54] sm:$0xf]
  %v190 = vld [vmem:[%s1 + $0x58] sm:$0xf]
  %v191 = vld [vmem:[%s1 + $0x5c] sm:$0xf]
  %v192 = vld [vmem:[%s1 + $0x60] sm:$0xf]
  %v193 = vld [vmem:[%s1 + $0x64] sm:$0xf]
  %v194 = vld [vmem:[%s1 + $0x68] sm:$0xf]
  %v195 = vld [vmem:[%s1 + $0x6c] sm:$0xf]
  %v196 = vld [vmem:[%s1 + $0x70] sm:$0xf]
  %v197 = vld [vmem:[%s1 + $0x74] sm:$0xf]
  %v198 = vld [vmem:[%s1 + $0x78] sm:$0xf]
  %v199 = vld [vmem:[%s1 + $0x7c] sm:$0xf]
  %v200 = vld [vmem:[%s1 + $0x80] sm:$0xf]
  %v201 = vld [vmem:[%s1 + $0x84] sm:$0xf]
  %v202 = vld [vmem:[%s2 + $0x2] sm:$0x1]
  %v203 = vlaneseq
  %v204 = vshrl.u32 %v203, 7
  %v205 = vsub.s32 0, %v204
  %v206 = vrot.slane %v202, %v205
  %v223 = vunpack.c.l.b16 %v186
  %v224 = vunpack.c.l.b16 %v187
  %v225 = vunpack.c.l.b16 %v188
  %v226 = vunpack.c.l.b16 %v189
  %v227 = vunpack.c.l.b16 %v190
  %v228 = vunpack.c.l.b16 %v191
  %v229 = vunpack.c.l.b16 %v192
  %v230 = vunpack.c.l.b16 %v193
  %v231 = vunpack.c.l.b16 %v194
  %v232 = vunpack.c.l.b16 %v195
  %v233 = vunpack.c.l.b16 %v196
  %v234 = vunpack.c.l.b16 %v197
  %v235 = vunpack.c.l.b16 %v198
  %v236 = vunpack.c.l.b16 %v199
  %v237 = vunpack.c.l.b16 %v200
  %v238 = vunpack.c.l.b16 %v201
  %v239 = vpack.c.b16 %v224, %v223
  %v240 = vpack.c.b16 %v226, %v225
  %v241 = vpack.c.b16 %v228, %v227
  %v242 = vpack.c.b16 %v230, %v229
  %v243 = vpack.c.b16 %v232, %v231
  %v244 = vpack.c.b16 %v234, %v233
  %v245 = vpack.c.b16 %v236, %v235
  %v246 = vpack.c.b16 %v238, %v237
  %255 = vmatprep.subr.bf16.mxu0 0
  %256 = vmatpush1.bf16.msra.mxu0 %v239
  %257 = vmatprep.subr.bf16.mxu0 0
  %258 = vmatpush1.bf16.msra.mxu0 %v240
  %259 = vmatprep.subr.bf16.mxu0 0
  %260 = vmatpush1.bf16.msra.mxu0 %v241
  %261 = vmatprep.subr.bf16.mxu0 0
  %262 = vmatpush1.bf16.msra.mxu0 %v242
  %263 = vmatprep.subr.bf16.mxu0 0
  %264 = vmatpush1.bf16.msra.mxu0 %v243
  %265 = vmatprep.subr.bf16.mxu0 0
  %266 = vmatpush1.bf16.msra.mxu0 %v244
  %267 = vmatprep.subr.bf16.mxu0 0
  %268 = vmatpush1.bf16.msra.mxu0 %v245
  %269 = vmatprep.subr.bf16.mxu0 0
  %270 = vmatpush1.bf16.msra.mxu0 %v246
  %271 = vmatprep.subr.bf16.mxu0 0
  %272 = vmatpush1.bf16.msra.mxu0 0
  %273 = vmatprep.subr.bf16.mxu0 0
  %274 = vmatpush1.bf16.msra.mxu0 0
  %275 = vmatprep.subr.bf16.mxu0 0
  %276 = vmatpush1.bf16.msra.mxu0 0
  %277 = vmatprep.subr.bf16.mxu0 0
  %278 = vmatpush1.bf16.msra.mxu0 0
  %279 = vmatprep.subr.bf16.mxu0 0
  %280 = vmatpush1.bf16.msra.mxu0 0
  %281 = vmatprep.subr.bf16.mxu0 0
  %282 = vmatpush1.bf16.msra.mxu0 0
  %283 = vmatprep.subr.bf16.mxu0 0
  %284 = vmatpush1.bf16.msra.mxu0 0
  %285 = vmatprep.subr.bf16.mxu0 0
  %286 = vmatpush1.bf16.msra.mxu0 0
  %287 = vmatprep.mubr.bf16.mxu0 0
  %288 = vmatmul.mubr.bf16.gmra.mrb[0].mxu0 %v185
  %v289 = vpop.f32.mrb[0].mxu0
  %v290 = vadd.f32 %v206, %v289
  %v291 = vpop.f32.mrb[0].mxu0
  %v292 = vpop.f32.mrb[0].mxu0
  %v293 = vpop.f32.mrb[0].mxu0
  %294 = vdwg.mxu0
  %295 = vst [vmem:[%s3] sm:$0xff] %v290
  // Predicated region
  $region14: #{psp_policy_forward.1} parent=0 // pred_check
    _
  $region15: #{psp_policy_forward.1} parent=0 // pred_check_branch
    %297 = sbr.rel (0) target = $region17
  $region16: #{psp_policy_forward.1} parent=0 // pred_region
    _
  $region17: #{psp_policy_forward.1} parent=0 // pred_fallthru
    _
  // Predicated region
  $region18: #{psp_policy_forward.1} parent=0 // pred_check
    _
  $region19: #{psp_policy_forward.1} parent=0 // pred_check_branch
    %299 = sbr.rel (0) target = $region21
  $region20: #{psp_policy_forward.1} parent=0 // pred_region
    _
  $region21: #{psp_policy_forward.1} parent=0 // pred_fallthru
    _

</llo_original>
